<compile_context>
chip_gen: v5e
topology: v5e:2x2
jax: 0.10.0
libtpu: 0.0.40
codegen_flags: <defaults>
</compile_context>

<pallas_src>
import jax
import jax.numpy as jnp
from jax.experimental import pallas as pl
from jax.experimental.pallas import tpu as pltpu
import numpy as np


# ----------------------------- Pallas kernel ------------------------------ #
def _hswish_kernel(x_ref, o_ref):
    # Widen inside the kernel (no-op for f32 inputs); HBM traffic stays in the
    # original dtype.
    x = x_ref[...].astype(jnp.float32)
    # hardtanh(x + 3, 0, 6) / 6  ->  clip(x + 3, 0, 6) * (1/6)
    y = x * (jnp.clip(x + 3.0, 0.0, 6.0) * (1.0 / 6.0))
    o_ref[...] = y.astype(o_ref.dtype)


_TARGET_BLOCK_BYTES = 4 * 1024 * 1024  # ~4 MiB/block; 4 buffers -> ~16 MiB VMEM


def _hswish_2d(x2d, target_block_bytes=_TARGET_BLOCK_BYTES):
    """Elementwise hard-swish over a lane-dense 2-D view (R, L), L % 128 == 0."""
    R, L = x2d.shape
    itemsize = jnp.dtype(x2d.dtype).itemsize
    # Rows per block targeting ~target_block_bytes, multiple of 8 (sublane).
    tile_rows = max(8, (target_block_bytes // (L * itemsize)) // 8 * 8)
    if tile_rows >= R:
        # Single block covering the full array (full dims -> no (8,128) rule).
        tile_rows = R
        grid = (1,)
    else:
        # Non-dividing grids are fine: Pallas masks the partial last block.
        grid = (pl.cdiv(R, tile_rows),)

    return pl.pallas_call(
        _hswish_kernel,
        out_shape=jax.ShapeDtypeStruct((R, L), x2d.dtype),
        grid_spec=pltpu.PrefetchScalarGridSpec(
            num_scalar_prefetch=0,
            grid=grid,
            in_specs=[pl.BlockSpec((tile_rows, L), lambda i: (i, 0))],
            out_specs=pl.BlockSpec((tile_rows, L), lambda i: (i, 0)),
        ),
        compiler_params=pltpu.CompilerParams(
            dimension_semantics=("parallel",),
            vmem_limit_bytes=32 * 1024 * 1024,
        ),
    )(x2d)


def _choose_lane(n):
    """Widest lane count (multiple of 128) that divides n, else None."""
    for lane in (1024, 512, 256, 128):
        if n % lane == 0:
            return lane
    return None


def _hswish(x):
    """Apply hard-swish elementwise to an arbitrarily-shaped array."""
    orig_shape = x.shape
    n = int(np.prod(orig_shape)) if len(orig_shape) > 0 else 1
    lane = _choose_lane(n)
    if lane is not None:
        # Common path: pure reshape (no copies), lane-wide 2-D view.
        y2d = _hswish_2d(x.reshape(n // lane, lane))
        return y2d.reshape(orig_shape)
    # Rare path: element count not a multiple of 128 -> minimal pad + slice.
    lane = 128
    pad = (-n) % lane
    flat = jnp.pad(x.reshape(-1), (0, pad))
    y2d = _hswish_2d(flat.reshape(-1, lane))
    return y2d.reshape(-1)[:n].reshape(orig_shape)


# ------------------------------ Module port ------------------------------- #
class QHSwishPallas:
    """JAX/Pallas port of Q_HSwish (default state: act_func=True, bits=[32])."""

    def __init__(self, act_func=True):
        self.n_lvs = [1]
        self.bits = [32]
        self.act_func = act_func
        # Parameters exist for parity; unused on the bits==32 path.
        self.a = jnp.zeros((1,), jnp.float32)
        self.b = 3.0 / 8.0
        self.c = jnp.zeros((1,), jnp.float32)
        self.d = -3.0 / 8.0

    def initialize(self, n_lvs, offset, diff):
        self.n_lvs = n_lvs
        val = np.log(np.exp(offset + diff) - 1.0).astype(np.float32)
        self.a = jnp.full((1,), val, jnp.float32)
        self.c = jnp.full((1,), val, jnp.float32)

    def __call__(self, x):
        if self.act_func:
            x = _hswish(x)
        if len(self.bits) == 1 and self.bits[0] == 32:
            return x
        # TODO(synk): quantization branch (softplus/round/scale) not reachable
        # in the module's default bits=[32] configuration.
        raise NotImplementedError("quantized path not reachable with bits=[32]")


# ------------------------------- reference -------------------------------- #
def _ref_forward(x):
    xf = x.astype(jnp.float32)
    return (xf * (jnp.clip(xf + 3.0, 0.0, 6.0) / 6.0)).astype(x.dtype)


if __name__ == "__main__":
    key = jax.random.PRNGKey(0)

    # 1) Main module-level test (f32, NCHW, fast no-pad path).
    x = jax.random.normal(key, (2, 4, 16, 16), dtype=jnp.float32) * 3.0
    mod = QHSwishPallas(act_func=True)
    y = jax.block_until_ready(mod(x))
    assert y.shape == x.shape and y.dtype == x.dtype
    np.testing.assert_allclose(np.asarray(y), np.asarray(_ref_forward(x)),
                               rtol=1e-6, atol=1e-6)

    # 2) bf16 stays bf16 in HBM (no wrapper upcast).
    xb = (jax.random.normal(jax.random.PRNGKey(1), (2, 4, 16, 16),
                            dtype=jnp.float32) * 3.0).astype(jnp.bfloat16)
    yb = jax.block_until_ready(mod(xb))
    assert yb.dtype == jnp.bfloat16 and yb.shape == xb.shape
    np.testing.assert_allclose(np.asarray(yb, dtype=np.float32),
                               np.asarray(_ref_forward(xb), dtype=np.float32),
                               rtol=1e-2, atol=1e-2)

    # 3) Awkward element count (not a multiple of 128) -> minimal pad path.
    xa = jax.random.normal(jax.random.PRNGKey(2), (3, 5, 7, 11),
                           dtype=jnp.float32) * 3.0
    ya = jax.block_until_ready(mod(xa))
    np.testing.assert_allclose(np.asarray(ya), np.asarray(_ref_forward(xa)),
                               rtol=1e-6, atol=1e-6)

    # 4) Direct kernel test with a tiny block target to exercise the multi-step
    #    grid and the masked partial last block (44 rows, tile_rows=8 -> 6 steps).
    x2d = jax.random.normal(jax.random.PRNGKey(3), (44, 128),
                            dtype=jnp.float32) * 3.0
    y2d = jax.block_until_ready(_hswish_2d(x2d, target_block_bytes=8 * 128 * 4))
    np.testing.assert_allclose(np.asarray(y2d), np.asarray(_ref_forward(x2d)),
                               rtol=1e-6, atol=1e-6)

    print("KERNEL_OK")
</pallas_src>

<mosaic_0001>
module attributes {stable_mosaic.version = 11 : i64} {
  func.func @_hswish_kernel(%arg0: i32, %arg1: memref<2x1024xf32, #tpu.memory_space<vmem>>, %arg2: memref<2x1024xf32, #tpu.memory_space<vmem>>) attributes {dimension_semantics = [#tpu.dimension_semantics<parallel>], iteration_bounds = array<i64: 1>, scalar_prefetch = 0 : i64, scratch_operands = 0 : i64, tpu.core_type = #tpu.core_type<tc>, window_params = [{transform_indices = @transform_0, window_bounds = array<i64: 2, 1024>}, {transform_indices = @transform_1, window_bounds = array<i64: 2, 1024>}]} {
    %c0 = arith.constant 0 : index
    %c0_0 = arith.constant 0 : index
    %0 = vector.load %arg1[%c0, %c0_0] : memref<2x1024xf32, #tpu.memory_space<vmem>>, vector<2x1024xf32>
    %cst = arith.constant 3.000000e+00 : f32
    %1 = vector.broadcast %cst : f32 to vector<2x1024xf32>
    %2 = arith.addf %0, %1 : vector<2x1024xf32>
    %cst_1 = arith.constant 0.000000e+00 : f32
    %cst_2 = arith.constant 6.000000e+00 : f32
    %3 = vector.broadcast %cst_1 : f32 to vector<2x1024xf32>
    %4 = arith.maximumf %3, %2 : vector<2x1024xf32>
    %5 = vector.broadcast %cst_2 : f32 to vector<2x1024xf32>
    %6 = arith.minimumf %5, %4 : vector<2x1024xf32>
    %cst_3 = arith.constant 0.166666672 : f32
    %7 = vector.broadcast %cst_3 : f32 to vector<2x1024xf32>
    %8 = arith.mulf %6, %7 : vector<2x1024xf32>
    %9 = arith.mulf %0, %8 : vector<2x1024xf32>
    %c0_4 = arith.constant 0 : index
    %c0_5 = arith.constant 0 : index
    %10 = vector.load %arg2[%c0_4, %c0_5] : memref<2x1024xf32, #tpu.memory_space<vmem>>, vector<2x1024xf32>
    tpu.vector_store %arg2[%c0_4, %c0_5], %9 {strides = array<i32>} : memref<2x1024xf32, #tpu.memory_space<vmem>>, vector<2x1024xf32>,
    return
  }
  func.func @transform_0(%arg0: i32) -> (i32, i32) {
    %c0_i32 = arith.constant 0 : i32
    %c0_i32_0 = arith.constant 0 : i32
    return %arg0, %c0_i32 : i32, i32
  }
  func.func @transform_1(%arg0: i32) -> (i32, i32) {
    %c0_i32 = arith.constant 0 : i32
    %c0_i32_0 = arith.constant 0 : i32
    return %arg0, %c0_i32 : i32, i32
  }
}

</mosaic_0001>

<llo_original>
// kernel: tpu_custom_call.1
$region0: #{tpu_custom_call.1}
  #allocation0 [shape = 'u32[]', space=smem, size = 0x4, offset = 0x4, fixed_abs, tag = 'smem constant byte address 0x4 - core index']
  #allocation1 [shape = 'u32[72,128]{1,0:T(1,128)}', space=vmem, size = 0x9000, scoped, tag = 'internal scratch']
  %s0 = inlined_call_operand.hbm [shape: f32[2,1024], index: 0, kind: input, shape index: {}]
  %s1 = inlined_call_operand.hbm [shape: f32[2,1024], index: 1, kind: output, shape index: {}]
  %s2 = sld [smem:[#allocation0]]
  $region18: #{tpu_custom_call.1} parent=0
    _
  %s4 = ssub.s32 1, %s2
  %s5 = scalar_select 0, %s4, %s2
  $region1: #{tpu_custom_call.1} parent=0
    #allocation2 [shape = 'u8[8192]{0}', space=vmem, size = 0x2000, scoped, tag = 'input window, operand 0, single buffered']
    #allocation3 [shape = 's32[1]{0}', space=sflag, size = 0x4, scoped, tag = 'scoped memory for tpu_custom_call.1']
    #allocation4 [shape = 's32[1]{0}', space=sflag, size = 0x4, scoped, tag = 'scoped memory for tpu_custom_call.1']
    #allocation5 [shape = 'u8[8192]{0}', space=vmem, size = 0x2000, scoped, tag = 'output window, operand 0, single buffered']
    %6 = vsyncpa [#allocation3], 0
    %7 = vsyncpa [#allocation4], 0
    // Predicated region
    $region2: #{tpu_custom_call.1} parent=1 // pred_check
      _
    $region3: #{tpu_custom_call.1} parent=1 // pred_check_branch
      %9 = sbr.rel (0) target = $region5
    $region4: #{tpu_custom_call.1} parent=1 // pred_region
      %11 = vsyncadd [#allocation3], 0
      %s13 = sshll.u32 %s0, 4
      %s14 = int_to_ptr.hbm [resolvable:$true] %s13
      %s15 = sshll.u32 [#allocation2], 4
      %s16 = int_to_ptr.vmem [resolvable:$true] %s15
      %18 = dma.hbm_to_vmem [thread:$0]  %s14, 256, %s16, [#allocation3]
    $region5: #{tpu_custom_call.1} parent=1 // pred_fallthru
      _
    // Predicated region
    $region6: #{tpu_custom_call.1} parent=1 // pred_check
      _
    $region7: #{tpu_custom_call.1} parent=1 // pred_check_branch
      %20 = sbr.rel (0) target = $region9
    $region8: #{tpu_custom_call.1} parent=1 // pred_region
      %22 = dma.done [#allocation3], 256
    $region9: #{tpu_custom_call.1} parent=1 // pred_fallthru
      _
    %v23 = vld [vmem:[#allocation2] sm:$0xff]
    %v24 = vld [vmem:[#allocation2 + $0x8] sm:$0xff]
    %v25 = vadd.f32 %v23, 3.0
    %v26 = vadd.f32 %v24, 3.0
    %v27 = vmax.f32 %v25, 0.0
    %v28 = vmax.f32 %v26, 0.0
    %v29 = vmin.f32 %v27, 6.0
    %v30 = vmin.f32 %v28, 6.0
    %v31 = vmul.f32 %v29, 0.16666667
    %v32 = vmul.f32 %v30, 0.16666667
    %v33 = vmul.f32 %v23, %v31
    %v34 = vmul.f32 %v24, %v32
    %35 = vst [vmem:[#allocation5] sm:$0xff] %v33
    %36 = vst [vmem:[#allocation5 + $0x8] sm:$0xff] %v34
    // Predicated region
    $region10: #{tpu_custom_call.1} parent=1 // pred_check
      _
    $region11: #{tpu_custom_call.1} parent=1 // pred_check_branch
      %38 = sbr.rel (0) target = $region13
    $region12: #{tpu_custom_call.1} parent=1 // pred_region
      %40 = vsyncadd [#allocation4], 0
      %s42 = sshll.u32 [#allocation5], 4
      %s43 = int_to_ptr.vmem [resolvable:$true] %s42
      %s44 = sshll.u32 %s1, 4
      %s45 = int_to_ptr.hbm [resolvable:$true] %s44
      %47 = dma.vmem_to_hbm [thread:$0]  %s43, 256, %s45, [#allocation4]
    $region13: #{tpu_custom_call.1} parent=1 // pred_fallthru
      _
    // Predicated region
    $region14: #{tpu_custom_call.1} parent=1 // pred_check
      _
    $region15: #{tpu_custom_call.1} parent=1 // pred_check_branch
      %49 = sbr.rel (0) target = $region17
    $region16: #{tpu_custom_call.1} parent=1 // pred_region
      %51 = dma.done [#allocation4], 256
    $region17: #{tpu_custom_call.1} parent=1 // pred_fallthru
      _
    %52 = vsyncpa [#allocation3], 1
    %53 = vsyncpa [#allocation4], 1

</llo_original>
